<compile_context>
chip_gen: v5e
topology: v5e:2x2
jax: 0.10.0
libtpu: 0.0.40
codegen_flags: <defaults>
</compile_context>

<pallas_src>
import functools

import jax
import jax.numpy as jnp
from jax.experimental import pallas as pl
from jax.experimental.pallas import tpu as pltpu

# ---- demo config (matches the PyTorch module's __init__ fields) ----
BATCH = 2
SEQ = 8
HIDDEN = 128          # config.hidden_size       (multiple of 128 -> lane-dense)
INTERMEDIATE = 256    # config.intermediate_size (multiple of 128 -> lane-dense)
HIDDEN_ACT = "silu"   # InternLM uses SiLU

# TODO(synk): only the common activations are mapped here (ACT2FN subset).
ACT2FN = {
    "silu": lambda x: x * jax.nn.sigmoid(x),
    "gelu": jax.nn.gelu,
    "relu": jax.nn.relu,
}


def _round_up(x, m):
    return (x + m - 1) // m * m


def _pick_i_tile(I, block_i):
    """Largest lane-aligned tile <= block_i that divides I (else full I)."""
    if I % block_i == 0:
        return block_i
    for cand in (1024, 512, 256, 128):
        if cand <= block_i and I % cand == 0:
            return cand
    return I


def _mlp_kernel(x_ref, wgu_ref, wd_ref, o_ref, acc_ref, *, act_fn, ti):
    i = pl.program_id(1)                       # I (reduction) axis, last in grid

    @pl.when(i == 0)
    def _():
        acc_ref[...] = jnp.zeros_like(acc_ref)

    x = x_ref[...]                                                       # (tm, H)
    # Fused gate|up projection: one MXU matmul, f32 accumulation.
    gu = jnp.dot(x, wgu_ref[...], preferred_element_type=jnp.float32)   # (tm, 2*ti)
    gate = gu[:, :ti]                          # lane-aligned static slices
    up = gu[:, ti:]
    # SiLU in f32 (sigmoid -> EUP), elementwise product -> VPU.
    inter = (act_fn(gate) * up).astype(wd_ref.dtype)                    # (tm, ti)
    # Down projection, accumulated across I tiles in f32 VMEM scratch.
    acc_ref[...] += jnp.dot(inter, wd_ref[...], preferred_element_type=jnp.float32)

    @pl.when(i == pl.num_programs(1) - 1)
    def _():
        o_ref[...] = acc_ref[...].astype(o_ref.dtype)


def internlm_mlp(x, w_gate, w_up, w_down, *, hidden_act="silu",
                 block_m=512, block_i=512, compute_dtype=None):
    """x: (..., H).  Weights pre-transposed to (in, out):
       w_gate (H, I), w_up (H, I), w_down (I, H)  (i.e. nn.Linear.weight.T)."""
    act_fn = ACT2FN[hidden_act]
    *lead, H = x.shape
    I = w_gate.shape[1]
    assert w_gate.shape == (H, I) and w_up.shape == (H, I) and w_down.shape == (I, H)

    out_dtype = x.dtype
    if compute_dtype is not None:
        x = x.astype(compute_dtype)
        w_gate = w_gate.astype(compute_dtype)
        w_up = w_up.astype(compute_dtype)
        w_down = w_down.astype(compute_dtype)

    # Flatten batch/seq into the MXU M dimension: fat matmuls, no per-batch steps.
    x2 = x.reshape(-1, H)
    M = x2.shape[0]

    # ---- intermediate (reduction) tiling ----
    ti = _pick_i_tile(I, block_i)
    ni = I // ti

    # ---- row (M) tiling ----
    sub = 16 if x2.dtype == jnp.bfloat16 else 8    # bf16 packed tile is (16, 128)
    tm = min(block_m, _round_up(M, sub))
    if M >= 512 and _round_up(M, tm) // tm < 2:
        # Ensure >= 2 row tiles so the "parallel" M axis can split across the
        # two TensorCores on v7x (each tile still MXU-friendly, >=256 rows).
        tm = max(256, _round_up(pl.cdiv(M, 2), 256))
    m_pad = _round_up(M, tm)
    if m_pad != M:                                 # pad only when actually needed
        x2 = jnp.pad(x2, ((0, m_pad - M), (0, 0)))
    nm = m_pad // tm

    # Pack [gate_tile_i | up_tile_i] column blocks -> one (H, 2*I) weight so the
    # kernel does a single fused gate/up matmul per I tile.
    w_gu = jnp.concatenate(
        [w_gate.reshape(H, ni, ti), w_up.reshape(H, ni, ti)], axis=2
    ).reshape(H, 2 * I)

    kernel = functools.partial(_mlp_kernel, act_fn=act_fn, ti=ti)

    x_itemsize = jnp.dtype(x2.dtype).itemsize
    out_itemsize = jnp.dtype(out_dtype).itemsize
    cost = pl.CostEstimate(
        flops=6 * m_pad * H * I,
        transcendentals=m_pad * I,
        bytes_accessed=(m_pad * H * x_itemsize          # activations in
                        + 3 * H * I * x_itemsize        # gate/up/down weights
                        + m_pad * H * out_itemsize),    # output
    )

    def build_call(single_buffer_weights):
        wkw = {"pipeline_mode": pl.Buffered(1)} if single_buffer_weights else {}
        w_bufs = 1 if single_buffer_weights else 2
        vmem_needed = (
            2 * tm * H * x_itemsize                      # x tile (double-buffered)
            + w_bufs * 3 * H * ti * x_itemsize           # fused gate/up + down tiles
            + 2 * tm * H * out_itemsize                  # out tile (double-buffered)
            + tm * H * 4                                 # f32 accumulator scratch
        )
        vmem_limit = min(max(int(vmem_needed * 3 // 2), 16 * 1024 * 1024),
                         100 * 1024 * 1024)
        return pl.pallas_call(
            kernel,
            out_shape=jax.ShapeDtypeStruct((m_pad, H), out_dtype),
            grid=(nm, ni),                               # reduction axis LAST
            in_specs=[
                pl.BlockSpec((tm, H), lambda m, i: (m, 0)),       # activations
                pl.BlockSpec((H, 2 * ti), lambda m, i: (0, i), **wkw),  # gate|up W
                pl.BlockSpec((ti, H), lambda m, i: (i, 0), **wkw),      # down W
            ],
            out_specs=pl.BlockSpec((tm, H), lambda m, i: (m, 0)),  # resident over I
            scratch_shapes=[pltpu.VMEM((tm, H), jnp.float32)],
            compiler_params=pltpu.CompilerParams(
                dimension_semantics=("parallel", "arbitrary"),
                vmem_limit_bytes=vmem_limit),
            cost_estimate=cost,
        )

    single_buffer = (ni == 1)   # weight block index constant over the whole grid
    try:
        out = build_call(single_buffer)(x2, w_gu, w_down)
    except Exception:
        # Fallback if pl.Buffered(1) is rejected by this JAX/Mosaic version.
        if not single_buffer:
            raise
        out = build_call(False)(x2, w_gu, w_down)

    if m_pad != M:
        out = out[:M]
    return out.reshape(*lead, H)


def reference_internlm_mlp(x, w_gate, w_up, w_down, hidden_act="silu"):
    """Pure-JAX replica of the PyTorch forward."""
    act_fn = ACT2FN[hidden_act]
    return (act_fn(x @ w_gate) * (x @ w_up)) @ w_down


if __name__ == "__main__":
    key = jax.random.PRNGKey(0)
    kx, kg, ku, kd = jax.random.split(key, 4)

    x = jax.random.normal(kx, (BATCH, SEQ, HIDDEN), jnp.float32)
    scale = 0.05
    # Weights already transposed to (in, out) == nn.Linear.weight.T, no bias.
    w_gate = scale * jax.random.normal(kg, (HIDDEN, INTERMEDIATE), jnp.float32)
    w_up = scale * jax.random.normal(ku, (HIDDEN, INTERMEDIATE), jnp.float32)
    w_down = scale * jax.random.normal(kd, (INTERMEDIATE, HIDDEN), jnp.float32)

    ref = reference_internlm_mlp(x, w_gate, w_up, w_down, HIDDEN_ACT)

    # f32 path, single I tile (weights constant over grid -> single-buffered).
    out = jax.block_until_ready(
        internlm_mlp(x, w_gate, w_up, w_down, hidden_act=HIDDEN_ACT))
    assert out.shape == x.shape
    assert jnp.allclose(out, ref, atol=2e-4, rtol=2e-4), (
        f"max abs err {jnp.max(jnp.abs(out - ref))}")

    # f32 path with the I axis actually tiled (2 reduction steps) -> exercises
    # the f32 accumulator + @pl.when init/writeback path.
    out_tiled = jax.block_until_ready(
        internlm_mlp(x, w_gate, w_up, w_down, hidden_act=HIDDEN_ACT, block_i=128))
    assert jnp.allclose(out_tiled, ref, atol=2e-4, rtol=2e-4), (
        f"tiled max abs err {jnp.max(jnp.abs(out_tiled - ref))}")

    # bf16 MXU-operand path (bf16 operands, f32 accumulation).
    out_bf16 = jax.block_until_ready(
        internlm_mlp(x, w_gate, w_up, w_down, hidden_act=HIDDEN_ACT,
                     compute_dtype=jnp.bfloat16))
    assert jnp.allclose(out_bf16, ref, atol=5e-2, rtol=5e-2), (
        f"bf16 max abs err {jnp.max(jnp.abs(out_bf16 - ref))}")

    print("KERNEL_OK")
</pallas_src>

<mosaic_0001>
module attributes {stable_mosaic.version = 11 : i64} {
  func.func @_mlp_kernel(%arg0: i32, %arg1: i32, %arg2: memref<16x128xf32, #tpu.memory_space<vmem>>, %arg3: memref<128x512xf32, #tpu.memory_space<vmem>>, %arg4: memref<256x128xf32, #tpu.memory_space<vmem>>, %arg5: memref<16x128xf32, #tpu.memory_space<vmem>>, %arg6: memref<16x128xf32, #tpu.memory_space<vmem>>) attributes {dimension_semantics = [#tpu.dimension_semantics<parallel>, #tpu.dimension_semantics<arbitrary>], iteration_bounds = array<i64: 1, 1>, scalar_prefetch = 0 : i64, scratch_operands = 1 : i64, tpu.core_type = #tpu.core_type<tc>, window_params = [{transform_indices = @transform_0, window_bounds = array<i64: 16, 128>}, {pipeline_mode = #tpu.pipeline_mode<synchronous>, transform_indices = @transform_1, window_bounds = array<i64: 128, 512>}, {pipeline_mode = #tpu.pipeline_mode<synchronous>, transform_indices = @transform_2, window_bounds = array<i64: 256, 128>}, {transform_indices = @transform_3, window_bounds = array<i64: 16, 128>}]} {
    %c0_i32 = arith.constant 0 : i32
    %0 = arith.cmpi eq, %arg1, %c0_i32 : i32
    %1 = arith.extui %0 : i1 to i32
    %c0_i32_0 = arith.constant 0 : i32
    %2 = arith.cmpi ne, %1, %c0_i32_0 : i32
    scf.if %2 {
      %cst_14 = arith.constant 0.000000e+00 : f32
      %23 = vector.broadcast %cst_14 : f32 to vector<16x128xf32>
      %c0_15 = arith.constant 0 : index
      %c0_16 = arith.constant 0 : index
      %24 = vector.load %arg6[%c0_15, %c0_16] : memref<16x128xf32, #tpu.memory_space<vmem>>, vector<16x128xf32>
      tpu.vector_store %arg6[%c0_15, %c0_16], %23 {strides = array<i32>} : memref<16x128xf32, #tpu.memory_space<vmem>>, vector<16x128xf32>,
    } else {
    }
    %c0 = arith.constant 0 : index
    %c0_1 = arith.constant 0 : index
    %3 = vector.load %arg2[%c0, %c0_1] : memref<16x128xf32, #tpu.memory_space<vmem>>, vector<16x128xf32>
    %c0_2 = arith.constant 0 : index
    %c0_3 = arith.constant 0 : index
    %4 = vector.load %arg3[%c0_2, %c0_3] : memref<128x512xf32, #tpu.memory_space<vmem>>, vector<128x512xf32>
    %cst = arith.constant dense<0.000000e+00> : vector<16x512xf32>
    %5 = tpu.matmul %3, %4, %cst {dimension_numbers = #tpu.dot_dimension_numbers<[1], [0], [0], [1], [0, 0, 1, 1], [], []>} : vector<16x128xf32>, vector<128x512xf32>, vector<16x512xf32> -> vector<16x512xf32>
    %6 = vector.extract_strided_slice %5 {offsets = [0, 0], sizes = [16, 256], strides = [1, 1]} : vector<16x512xf32> to vector<16x256xf32>
    %7 = vector.extract_strided_slice %5 {offsets = [0, 256], sizes = [16, 256], strides = [1, 1]} : vector<16x512xf32> to vector<16x256xf32>
    %8 = arith.negf %6 : vector<16x256xf32>
    %9 = math.exp %8 : vector<16x256xf32>
    %cst_4 = arith.constant 1.000000e+00 : f32
    %10 = vector.broadcast %cst_4 : f32 to vector<16x256xf32>
    %11 = arith.addf %10, %9 : vector<16x256xf32>
    %12 = arith.divf %10, %11 : vector<16x256xf32>
    %13 = arith.mulf %6, %12 : vector<16x256xf32>
    %14 = arith.mulf %13, %7 : vector<16x256xf32>
    %c0_5 = arith.constant 0 : index
    %c0_6 = arith.constant 0 : index
    %15 = vector.load %arg6[%c0_5, %c0_6] : memref<16x128xf32, #tpu.memory_space<vmem>>, vector<16x128xf32>
    %c0_7 = arith.constant 0 : index
    %c0_8 = arith.constant 0 : index
    %16 = vector.load %arg4[%c0_7, %c0_8] : memref<256x128xf32, #tpu.memory_space<vmem>>, vector<256x128xf32>
    %cst_9 = arith.constant dense<0.000000e+00> : vector<16x128xf32>
    %17 = tpu.matmul %14, %16, %cst_9 {dimension_numbers = #tpu.dot_dimension_numbers<[1], [0], [0], [1], [0, 0, 1, 1], [], []>} : vector<16x256xf32>, vector<256x128xf32>, vector<16x128xf32> -> vector<16x128xf32>
    %18 = arith.addf %15, %17 : vector<16x128xf32>
    %c0_10 = arith.constant 0 : index
    %c0_11 = arith.constant 0 : index
    %19 = vector.load %arg6[%c0_10, %c0_11] : memref<16x128xf32, #tpu.memory_space<vmem>>, vector<16x128xf32>
    tpu.vector_store %arg6[%c0_10, %c0_11], %18 {strides = array<i32>} : memref<16x128xf32, #tpu.memory_space<vmem>>, vector<16x128xf32>,
    %c0_i32_12 = arith.constant 0 : i32
    %20 = arith.cmpi eq, %arg1, %c0_i32_12 : i32
    %21 = arith.extui %20 : i1 to i32
    %c0_i32_13 = arith.constant 0 : i32
    %22 = arith.cmpi ne, %21, %c0_i32_13 : i32
    scf.if %22 {
      %c0_14 = arith.constant 0 : index
      %c0_15 = arith.constant 0 : index
      %23 = vector.load %arg6[%c0_14, %c0_15] : memref<16x128xf32, #tpu.memory_space<vmem>>, vector<16x128xf32>
      %c0_16 = arith.constant 0 : index
      %c0_17 = arith.constant 0 : index
      %24 = vector.load %arg5[%c0_16, %c0_17] : memref<16x128xf32, #tpu.memory_space<vmem>>, vector<16x128xf32>
      tpu.vector_store %arg5[%c0_16, %c0_17], %23 {strides = array<i32>} : memref<16x128xf32, #tpu.memory_space<vmem>>, vector<16x128xf32>,
    } else {
    }
    return
  }
  func.func @transform_0(%arg0: i32, %arg1: i32) -> (i32, i32) {
    %c0_i32 = arith.constant 0 : i32
    %c0_i32_0 = arith.constant 0 : i32
    return %arg0, %c0_i32 : i32, i32
  }
  func.func @transform_1(%arg0: i32, %arg1: i32) -> (i32, i32) {
    %c0_i32 = arith.constant 0 : i32
    %c0_i32_0 = arith.constant 0 : i32
    return %c0_i32, %arg1 : i32, i32
  }
  func.func @transform_2(%arg0: i32, %arg1: i32) -> (i32, i32) {
    %c0_i32 = arith.constant 0 : i32
    %c0_i32_0 = arith.constant 0 : i32
    return %arg1, %c0_i32 : i32, i32
  }
  func.func @transform_3(%arg0: i32, %arg1: i32) -> (i32, i32) {
    %c0_i32 = arith.constant 0 : i32
    %c0_i32_0 = arith.constant 0 : i32
    return %arg0, %c0_i32 : i32, i32
  }
}

module attributes {stable_mosaic.version = 11 : i64} {
  func.func @_mlp_kernel(%arg0: i32, %arg1: i32, %arg2: memref<16x128xf32, #tpu.memory_space<vmem>>, %arg3: memref<128x512xf32, #tpu.memory_space<vmem>>, %arg4: memref<256x128xf32, #tpu.memory_space<vmem>>, %arg5: memref<16x128xf32, #tpu.memory_space<vmem>>, %arg6: memref<16x128xf32, #tpu.memory_space<vmem>>) attributes {dimension_semantics = [#tpu.dimension_semantics<parallel>, #tpu.dimension_semantics<arbitrary>], iteration_bounds = array<i64: 1, 1>, scalar_prefetch = 0 : i64, scratch_operands = 1 : i64, tpu.core_type = #tpu.core_type<tc>, window_params = [{transform_indices = @transform_0, window_bounds = array<i64: 16, 128>}, {transform_indices = @transform_1, window_bounds = array<i64: 128, 512>}, {transform_indices = @transform_2, window_bounds = array<i64: 256, 128>}, {transform_indices = @transform_3, window_bounds = array<i64: 16, 128>}]} {
    %c0_i32 = arith.constant 0 : i32
    %0 = arith.cmpi eq, %arg1, %c0_i32 : i32
    %1 = arith.extui %0 : i1 to i32
    %c0_i32_0 = arith.constant 0 : i32
    %2 = arith.cmpi ne, %1, %c0_i32_0 : i32
    scf.if %2 {
      %cst_14 = arith.constant 0.000000e+00 : f32
      %23 = vector.broadcast %cst_14 : f32 to vector<16x128xf32>
      %c0_15 = arith.constant 0 : index
      %c0_16 = arith.constant 0 : index
      %24 = vector.load %arg6[%c0_15, %c0_16] : memref<16x128xf32, #tpu.memory_space<vmem>>, vector<16x128xf32>
      tpu.vector_store %arg6[%c0_15, %c0_16], %23 {strides = array<i32>} : memref<16x128xf32, #tpu.memory_space<vmem>>, vector<16x128xf32>,
    } else {
    }
    %c0 = arith.constant 0 : index
    %c0_1 = arith.constant 0 : index
    %3 = vector.load %arg2[%c0, %c0_1] : memref<16x128xf32, #tpu.memory_space<vmem>>, vector<16x128xf32>
    %c0_2 = arith.constant 0 : index
    %c0_3 = arith.constant 0 : index
    %4 = vector.load %arg3[%c0_2, %c0_3] : memref<128x512xf32, #tpu.memory_space<vmem>>, vector<128x512xf32>
    %cst = arith.constant dense<0.000000e+00> : vector<16x512xf32>
    %5 = tpu.matmul %3, %4, %cst {dimension_numbers = #tpu.dot_dimension_numbers<[1], [0], [0], [1], [0, 0, 1, 1], [], []>} : vector<16x128xf32>, vector<128x512xf32>, vector<16x512xf32> -> vector<16x512xf32>
    %6 = vector.extract_strided_slice %5 {offsets = [0, 0], sizes = [16, 256], strides = [1, 1]} : vector<16x512xf32> to vector<16x256xf32>
    %7 = vector.extract_strided_slice %5 {offsets = [0, 256], sizes = [16, 256], strides = [1, 1]} : vector<16x512xf32> to vector<16x256xf32>
    %8 = arith.negf %6 : vector<16x256xf32>
    %9 = math.exp %8 : vector<16x256xf32>
    %cst_4 = arith.constant 1.000000e+00 : f32
    %10 = vector.broadcast %cst_4 : f32 to vector<16x256xf32>
    %11 = arith.addf %10, %9 : vector<16x256xf32>
    %12 = arith.divf %10, %11 : vector<16x256xf32>
    %13 = arith.mulf %6, %12 : vector<16x256xf32>
    %14 = arith.mulf %13, %7 : vector<16x256xf32>
    %c0_5 = arith.constant 0 : index
    %c0_6 = arith.constant 0 : index
    %15 = vector.load %arg6[%c0_5, %c0_6] : memref<16x128xf32, #tpu.memory_space<vmem>>, vector<16x128xf32>
    %c0_7 = arith.constant 0 : index
    %c0_8 = arith.constant 0 : index
    %16 = vector.load %arg4[%c0_7, %c0_8] : memref<256x128xf32, #tpu.memory_space<vmem>>, vector<256x128xf32>
    %cst_9 = arith.constant dense<0.000000e+00> : vector<16x128xf32>
    %17 = tpu.matmul %14, %16, %cst_9 {dimension_numbers = #tpu.dot_dimension_numbers<[1], [0], [0], [1], [0, 0, 1, 1], [], []>} : vector<16x256xf32>, vector<256x128xf32>, vector<16x128xf32> -> vector<16x128xf32>
    %18 = arith.addf %15, %17 : vector<16x128xf32>
    %c0_10 = arith.constant 0 : index
    %c0_11 = arith.constant 0 : index
    %19 = vector.load %arg6[%c0_10, %c0_11] : memref<16x128xf32, #tpu.memory_space<vmem>>, vector<16x128xf32>
    tpu.vector_store %arg6[%c0_10, %c0_11], %18 {strides = array<i32>} : memref<16x128xf32, #tpu.memory_space<vmem>>, vector<16x128xf32>,
    %c0_i32_12 = arith.constant 0 : i32
    %20 = arith.cmpi eq, %arg1, %c0_i32_12 : i32
    %21 = arith.extui %20 : i1 to i32
    %c0_i32_13 = arith.constant 0 : i32
    %22 = arith.cmpi ne, %21, %c0_i32_13 : i32
    scf.if %22 {
      %c0_14 = arith.constant 0 : index
      %c0_15 = arith.constant 0 : index
      %23 = vector.load %arg6[%c0_14, %c0_15] : memref<16x128xf32, #tpu.memory_space<vmem>>, vector<16x128xf32>
      %c0_16 = arith.constant 0 : index
      %c0_17 = arith.constant 0 : index
      %24 = vector.load %arg5[%c0_16, %c0_17] : memref<16x128xf32, #tpu.memory_space<vmem>>, vector<16x128xf32>
      tpu.vector_store %arg5[%c0_16, %c0_17], %23 {strides = array<i32>} : memref<16x128xf32, #tpu.memory_space<vmem>>, vector<16x128xf32>,
    } else {
    }
    return
  }
  func.func @transform_0(%arg0: i32, %arg1: i32) -> (i32, i32) {
    %c0_i32 = arith.constant 0 : i32
    %c0_i32_0 = arith.constant 0 : i32
    return %arg0, %c0_i32 : i32, i32
  }
  func.func @transform_1(%arg0: i32, %arg1: i32) -> (i32, i32) {
    %c0_i32 = arith.constant 0 : i32
    %c0_i32_0 = arith.constant 0 : i32
    return %c0_i32, %arg1 : i32, i32
  }
  func.func @transform_2(%arg0: i32, %arg1: i32) -> (i32, i32) {
    %c0_i32 = arith.constant 0 : i32
    %c0_i32_0 = arith.constant 0 : i32
    return %arg1, %c0_i32 : i32, i32
  }
  func.func @transform_3(%arg0: i32, %arg1: i32) -> (i32, i32) {
    %c0_i32 = arith.constant 0 : i32
    %c0_i32_0 = arith.constant 0 : i32
    return %arg0, %c0_i32 : i32, i32
  }
}

</mosaic_0001>

<llo_original>
// kernel: tpu_custom_call.1
$region0: #{tpu_custom_call.1}
  #allocation0 [shape = 'u32[]', space=smem, size = 0x4, offset = 0x4, fixed_abs, tag = 'smem constant byte address 0x4 - core index']
  #allocation1 [shape = 'u32[72,128]{1,0:T(1,128)}', space=vmem, size = 0x9000, scoped, tag = 'internal scratch']
  #allocation2 [shape = 'f32[16,128]{1,0:T(8,128)}', space=vmem, size = 0x2000, scoped, tag = 'scratch operand']
  %s0 = inlined_call_operand.hbm [shape: f32[16,128], index: 0, kind: input, shape index: {}]
  %s1 = inlined_call_operand.hbm [shape: f32[128,512], index: 1, kind: input, shape index: {}]
  %s2 = inlined_call_operand.hbm [shape: f32[256,128], index: 2, kind: input, shape index: {}]
  %s3 = inlined_call_operand.hbm [shape: f32[16,128], index: 3, kind: output, shape index: {}]
  %s4 = sld [smem:[#allocation0]]
  $region42: #{tpu_custom_call.1} parent=0
    _
  %s6 = ssub.s32 1, %s4
  %s7 = scalar_select 0, %s6, %s4
  $region1: #{tpu_custom_call.1} parent=0
    #allocation3 [shape = 'u8[8192]{0}', space=vmem, size = 0x2000, scoped, tag = 'input window, operand 0, single buffered']
    #allocation4 [shape = 's32[1]{0}', space=sflag, size = 0x4, scoped, tag = 'scoped memory for tpu_custom_call.1']
    #allocation5 [shape = 's32[1]{0}', space=sflag, size = 0x4, scoped, tag = 'scoped memory for tpu_custom_call.1']
    #allocation6 [shape = 'u8[262144]{0}', space=vmem, size = 0x40000, scoped, tag = 'input window, operand 1, single buffered']
    #allocation7 [shape = 's32[1]{0}', space=sflag, size = 0x4, scoped, tag = 'scoped memory for tpu_custom_call.1']
    #allocation8 [shape = 'u8[131072]{0}', space=vmem, size = 0x20000, scoped, tag = 'input window, operand 2, single buffered']
    #allocation9 [shape = 'u8[8192]{0}', space=vmem, size = 0x2000, scoped, tag = 'output window, operand 0, single buffered']
    %8 = vsyncpa [#allocation4], 0
    %9 = vsyncpa [#allocation7], 0
    %10 = vsyncpa [#allocation5], 0
    // Predicated region
    $region2: #{tpu_custom_call.1} parent=1 // pred_check
      _
    $region3: #{tpu_custom_call.1} parent=1 // pred_check_branch
      %12 = sbr.rel (0) target = $region5
    $region4: #{tpu_custom_call.1} parent=1 // pred_region
      %14 = vsyncadd [#allocation4], 0
      %s15 = sshll.u32 %s0, 4
      %s16 = int_to_ptr.hbm [resolvable:$true] %s15
      %s17 = sshll.u32 [#allocation3], 4
      %s18 = int_to_ptr.vmem [resolvable:$true] %s17
      %23 = dma.hbm_to_vmem [thread:$0]  %s16, 256, %s18, [#allocation4], 128, 128, 8
    $region5: #{tpu_custom_call.1} parent=1 // pred_fallthru
      _
    // Predicated region
    $region6: #{tpu_custom_call.1} parent=1 // pred_check
      _
    $region7: #{tpu_custom_call.1} parent=1 // pred_check_branch
      %25 = sbr.rel (0) target = $region9
    $region8: #{tpu_custom_call.1} parent=1 // pred_region
      %27 = vsyncadd [#allocation7], 0
      %s28 = sshll.u32 %s1, 4
      %s29 = int_to_ptr.hbm [resolvable:$true] %s28
      %s30 = sshll.u32 [#allocation6], 4
      %s31 = int_to_ptr.vmem [resolvable:$true] %s30
      %36 = dma.hbm_to_vmem [thread:$0]  %s29, 8192, %s31, [#allocation7], 512, 512, 32
    $region9: #{tpu_custom_call.1} parent=1 // pred_fallthru
      _
    // Predicated region
    $region10: #{tpu_custom_call.1} parent=1 // pred_check
      _
    $region11: #{tpu_custom_call.1} parent=1 // pred_check_branch
      %38 = sbr.rel (0) target = $region13
    $region12: #{tpu_custom_call.1} parent=1 // pred_region
      %40 = vsyncadd [#allocation7], 0
      %s41 = sshll.u32 %s2, 4
      %s42 = int_to_ptr.hbm [resolvable:$true] %s41
      %s43 = sshll.u32 [#allocation8], 4
      %s44 = int_to_ptr.vmem [resolvable:$true] %s43
      %49 = dma.hbm_to_vmem [thread:$0]  %s42, 4096, %s44, [#allocation7], 128, 128, 8
    $region13: #{tpu_custom_call.1} parent=1 // pred_fallthru
      _
    // Predicated region
    $region14: #{tpu_custom_call.1} parent=1 // pred_check
      _
    $region15: #{tpu_custom_call.1} parent=1 // pred_check_branch
      %51 = sbr.rel (0) target = $region17
    $region16: #{tpu_custom_call.1} parent=1 // pred_region
      %53 = dma.done [#allocation4], 256
    $region17: #{tpu_custom_call.1} parent=1 // pred_fallthru
      _
    // Predicated region
    $region18: #{tpu_custom_call.1} parent=1 // pred_check
      _
    $region19: #{tpu_custom_call.1} parent=1 // pred_check_branch
      %55 = sbr.rel (0) target = $region21
    $region20: #{tpu_custom_call.1} parent=1 // pred_region
      %57 = dma.done [#allocation7], 8192
    $region21: #{tpu_custom_call.1} parent=1 // pred_fallthru
      _
    // Predicated region
    $region22: #{tpu_custom_call.1} parent=1 // pred_check
      _
    $region23: #{tpu_custom_call.1} parent=1 // pred_check_branch
      %59 = sbr.rel (0) target = $region25
    $region24: #{tpu_custom_call.1} parent=1 // pred_region
      %61 = dma.done [#allocation7], 4096
    $region25: #{tpu_custom_call.1} parent=1 // pred_fallthru
      _
    %p62 = scmp.eq.s32.totalorder 0, 0
    // Predicated region
    $region26: #{tpu_custom_call.1} parent=1 // pred_check
      %p63 = pneg %p62
    $region27: #{tpu_custom_call.1} parent=1 // pred_check_branch
      %65 = sbr.rel (%p63) target = $region29
    $region28: #{tpu_custom_call.1} parent=1 // pred_region
      %66 = vst [vmem:[#allocation2] sm:$0xff] 0.0
      %67 = vst [vmem:[#allocation2 + $0x8] sm:$0xff] 0.0
    $region29: #{tpu_custom_call.1} parent=1 // pred_fallthru
      _
    %v68 = vld [vmem:[#allocation3] sm:$0xff]
    %v69 = vld [vmem:[#allocation3 + $0x8] sm:$0xff]
    %v70 = vld [vmem:[#allocation6] sm:$0xff]
    %v71 = vld [vmem:[#allocation6 + $0x8] sm:$0xff]
    %v72 = vld [vmem:[#allocation6 + $0x10] sm:$0xff]
    %v73 = vld [vmem:[#allocation6 + $0x18] sm:$0xff]
    %v74 = vld [vmem:[#allocation6 + $0x20] sm:$0xff]
    %v75 = vld [vmem:[#allocation6 + $0x28] sm:$0xff]
    %v76 = vld [vmem:[#allocation6 + $0x30] sm:$0xff]
    %v77 = vld [vmem:[#allocation6 + $0x38] sm:$0xff]
    %v78 = vld [vmem:[#allocation6 + $0x40] sm:$0xff]
    %v79 = vld [vmem:[#allocation6 + $0x48] sm:$0xff]
    %v80 = vld [vmem:[#allocation6 + $0x50] sm:$0xff]
    %v81 = vld [vmem:[#allocation6 + $0x58] sm:$0xff]
    %v82 = vld [vmem:[#allocation6 + $0x60] sm:$0xff]
    %v83 = vld [vmem:[#allocation6 + $0x68] sm:$0xff]
    %v84 = vld [vmem:[#allocation6 + $0x70] sm:$0xff]
    %v85 = vld [vmem:[#allocation6 + $0x78] sm:$0xff]
    %v86 = vld [vmem:[#allocation6 + $0x80] sm:$0xff]
    %v87 = vld [vmem:[#allocation6 + $0x88] sm:$0xff]
    %v88 = vld [vmem:[#allocation6 + $0x90] sm:$0xff]
    %v89 = vld [vmem:[#allocation6 + $0x98] sm:$0xff]
    %v90 = vld [vmem:[#allocation6 + $0xa0] sm:$0xff]
    %v91 = vld [vmem:[#allocation6 + $0xa8] sm:$0xff]
    %v92 = vld [vmem:[#allocation6 + $0xb0] sm:$0xff]
    %v93 = vld [vmem:[#allocation6 + $0xb8] sm:$0xff]
    %v94 = vld [vmem:[#allocation6 + $0xc0] sm:$0xff]
    %v95 = vld [vmem:[#allocation6 + $0xc8] sm:$0xff]
    %v96 = vld [vmem:[#allocation6 + $0xd0] sm:$0xff]
    %v97 = vld [vmem:[#allocation6 + $0xd8] sm:$0xff]
    %v98 = vld [vmem:[#allocation6 + $0xe0] sm:$0xff]
    %v99 = vld [vmem:[#allocation6 + $0xe8] sm:$0xff]
    %v100 = vld [vmem:[#allocation6 + $0xf0] sm:$0xff]
    %v101 = vld [vmem:[#allocation6 + $0xf8] sm:$0xff]
    %v102 = vld [vmem:[#allocation6 + $0x100] sm:$0xff]
    %v103 = vld [vmem:[#allocation6 + $0x108] sm:$0xff]
    %v104 = vld [vmem:[#allocation6 + $0x110] sm:$0xff]
    %v105 = vld [vmem:[#allocation6 + $0x118] sm:$0xff]
    %v106 = vld [vmem:[#allocation6 + $0x120] sm:$0xff]
    %v107 = vld [vmem:[#allocation6 + $0x128] sm:$0xff]
    %v108 = vld [vmem:[#allocation6 + $0x130] sm:$0xff]
    %v109 = vld [vmem:[#allocation6 + $0x138] sm:$0xff]
    %v110 = vld [vmem:[#allocation6 + $0x140] sm:$0xff]
    %v111 = vld [vmem:[#allocation6 + $0x148] sm:$0xff]
    %v112 = vld [vmem:[#allocation6 + $0x150] sm:$0xff]
    %v113 = vld [vmem:[#allocation6 + $0x158] sm:$0xff]
    %v114 = vld [vmem:[#allocation6 + $0x160] sm:$0xff]
    %v115 = vld [vmem:[#allocation6 + $0x168] sm:$0xff]
    %v116 = vld [vmem:[#allocation6 + $0x170] sm:$0xff]
    %v117 = vld [vmem:[#allocation6 + $0x178] sm:$0xff]
    %v118 = vld [vmem:[#allocation6 + $0x180] sm:$0xff]
    %v119 = vld [vmem:[#allocation6 + $0x188] sm:$0xff]
    %v120 = vld [vmem:[#allocation6 + $0x190] sm:$0xff]
    %v121 = vld [vmem:[#allocation6 + $0x198] sm:$0xff]
    %v122 = vld [vmem:[#allocation6 + $0x1a0] sm:$0xff]
    %v123 = vld [vmem:[#allocation6 + $0x1a8] sm:$0xff]
    %v124 = vld [vmem:[#allocation6 + $0x1b0] sm:$0xff]
    %v125 = vld [vmem:[#allocation6 + $0x1b8] sm:$0xff]
    %v126 = vld [vmem:[#allocation6 + $0x1c0] sm:$0xff]
    %v127 = vld [vmem:[#allocation6 + $0x1c8] sm:$0xff]
    %v128 = vld [vmem:[#allocation6 + $0x1d0] sm:$0xff]
    %v129 = vld [vmem:[#allocation6 + $0x1d8] sm:$0xff]
    %v130 = vld [vmem:[#allocation6 + $0x1e0] sm:$0xff]
    %v131 = vld [vmem:[#allocation6 + $0x1e8] sm:$0xff]
    %v132 = vld [vmem:[#allocation6 + $0x1f0] sm:$0xff]
    %v133 = vld [vmem:[#allocation6 + $0x1f8] sm:$0xff]
    %134 = vmatpush.msra.mxu0 %v130
    %135 = vmatpush.msra.mxu0 %v126
    %136 = vmatpush.msra.mxu0 %v122
    %137 = vmatpush.msra.mxu0 %v118
    %138 = vmatpush.msra.mxu0 %v114
    %139 = vmatpush.msra.mxu0 %v110
    %140 = vmatpush.msra.mxu0 %v106
    %141 = vmatpush.msra.mxu0 %v102
    %142 = vmatpush.msra.mxu0 %v98
    %143 = vmatpush.msra.mxu0 %v94
    %144 = vmatpush.msra.mxu0 %v90
    %145 = vmatpush.msra.mxu0 %v86
    %146 = vmatpush.msra.mxu0 %v82
    %147 = vmatpush.msra.mxu0 %v78
    %148 = vmatpush.msra.mxu0 %v74
    %149 = vmatpush.msra.mxu0 %v70
    %150 = vmatmul.f32.gmra.mxu0 %v68
    %v151 = vpop.f32.mrf.mxu0
    %v152 = vadd.f32 0.0, %v151
    %153 = vmatmul.f32.gmra.mxu0 %v69
    %v154 = vpop.f32.mrf.mxu0
    %v155 = vadd.f32 0.0, %v154
    %156 = vdwg.mxu0
    %157 = vmatpush.msra.mxu0 %v131
    %158 = vmatpush.msra.mxu0 %v127
    %159 = vmatpush.msra.mxu0 %v123
    %160 = vmatpush.msra.mxu0 %v119
    %161 = vmatpush.msra.mxu0 %v115
    %162 = vmatpush.msra.mxu0 %v111
    %163 = vmatpush.msra.mxu0 %v107
    %164 = vmatpush.msra.mxu0 %v103
    %165 = vmatpush.msra.mxu0 %v99
    %166 = vmatpush.msra.mxu0 %v95
    %167 = vmatpush.msra.mxu0 %v91
    %168 = vmatpush.msra.mxu0 %v87
    %169 = vmatpush.msra.mxu0 %v83
    %170 = vmatpush.msra.mxu0 %v79
    %171 = vmatpush.msra.mxu0 %v75
    %172 = vmatpush.msra.mxu0 %v71
    %173 = vmatmul.f32.gmra.mxu0 %v68
    %v174 = vpop.f32.mrf.mxu0
    %v175 = vadd.f32 0.0, %v174
    %176 = vmatmul.f32.gmra.mxu0 %v69
    %v177 = vpop.f32.mrf.mxu0
    %v178 = vadd.f32 0.0, %v177
    %179 = vdwg.mxu0
    %180 = vmatpush.msra.mxu0 %v132
    %181 = vmatpush.msra.mxu0 %v128
    %182 = vmatpush.msra.mxu0 %v124
    %183 = vmatpush.msra.mxu0 %v120
    %184 = vmatpush.msra.mxu0 %v116
    %185 = vmatpush.msra.mxu0 %v112
    %186 = vmatpush.msra.mxu0 %v108
    %187 = vmatpush.msra.mxu0 %v104
    %188 = vmatpush.msra.mxu0 %v100
    %189 = vmatpush.msra.mxu0 %v96
    %190 = vmatpush.msra.mxu0 %v92
    %191 = vmatpush.msra.mxu0 %v88
    %192 = vmatpush.msra.mxu0 %v84
    %193 = vmatpush.msra.mxu0 %v80
    %194 = vmatpush.msra.mxu0 %v76
    %195 = vmatpush.msra.mxu0 %v72
    %196 = vmatmul.f32.gmra.mxu0 %v68
    %v197 = vpop.f32.mrf.mxu0
    %v198 = vadd.f32 0.0, %v197
    %199 = vmatmul.f32.gmra.mxu0 %v69
    %v200 = vpop.f32.mrf.mxu0
    %v201 = vadd.f32 0.0, %v200
    %202 = vdwg.mxu0
    %203 = vmatpush.msra.mxu0 %v133
    %204 = vmatpush.msra.mxu0 %v129
    %205 = vmatpush.msra.mxu0 %v125
    %206 = vmatpush.msra.mxu0 %v121
    %207 = vmatpush.msra.mxu0 %v117
    %208 = vmatpush.msra.mxu0 %v113
    %209 = vmatpush.msra.mxu0 %v109
    %210 = vmatpush.msra.mxu0 %v105
    %211 = vmatpush.msra.mxu0 %v101
    %212 = vmatpush.msra.mxu0 %v97
    %213 = vmatpush.msra.mxu0 %v93
    %214 = vmatpush.msra.mxu0 %v89
    %215 = vmatpush.msra.mxu0 %v85
    %216 = vmatpush.msra.mxu0 %v81
    %217 = vmatpush.msra.mxu0 %v77
    %218 = vmatpush.msra.mxu0 %v73
    %219 = vmatmul.f32.gmra.mxu0 %v68
    %v220 = vpop.f32.mrf.mxu0
    %v221 = vadd.f32 0.0, %v220
    %222 = vmatmul.f32.gmra.mxu0 %v69
    %v223 = vpop.f32.mrf.mxu0
    %v224 = vadd.f32 0.0, %v223
    %225 = vdwg.mxu0
    %v226 = vxor.u32 %v152, 2147483648
    %v227 = vxor.u32 %v175, 2147483648
    %v228 = vxor.u32 %v155, 2147483648
    %v229 = vxor.u32 %v178, 2147483648
    %v230 = vmul.f32 %v226, 1.442695
    %v231 = vpow.pop %v230
    %v232 = vmul.f32 %v227, 1.442695
    %v233 = vpow.pop %v232
    %v234 = vmul.f32 %v228, 1.442695
    %v235 = vpow.pop %v234
    %v236 = vmul.f32 %v229, 1.442695
    %v237 = vpow.pop %v236
    %v238 = vadd.f32 %v231, 1.0
    %v239 = vadd.f32 %v233, 1.0
    %v240 = vadd.f32 %v235, 1.0
    %v241 = vadd.f32 %v237, 1.0
    %v242 = vrcp.pop %v238
    %v243 = vmul.f32 %v238, %v242
    %v244 = vsub.f32 1.0, %v243
    %v245 = vmul.f32 %v242, %v244
    %v246 = vadd.f32 %v242, %v245
    %vm247 = vweird.f32 %v238
    %vm248 = vweird.f32 %v242
    %vm249 = vmor %vm247, %vm248
    %v250 = vsel %vm249, %v242, %v246
    %v251 = vand.u32 2147483647, %v238
    %vm252 = vcmp.eq.f32.partialorder %v251, 8.507059e+37
    %v253 = vand.u32 %v238, 2147483648
    %v254 = vor.u32 1.1754944e-38, %v253
    %v255 = vsel %vm252, %v254, %v250
    %v256 = vmul.f32 1.0, %v255
    %v257 = vrcp.pop %v239
    %v258 = vmul.f32 %v239, %v257
    %v259 = vsub.f32 1.0, %v258
    %v260 = vmul.f32 %v257, %v259
    %v261 = vadd.f32 %v257, %v260
    %vm262 = vweird.f32 %v239
    %vm263 = vweird.f32 %v257
    %vm264 = vmor %vm262, %vm263
    %v265 = vsel %vm264, %v257, %v261
    %v266 = vand.u32 2147483647, %v239
    %vm267 = vcmp.eq.f32.partialorder %v266, 8.507059e+37
    %v268 = vand.u32 %v239, 2147483648
    %v269 = vor.u32 1.1754944e-38, %v268
    %v270 = vsel %vm267, %v269, %v265
    %v271 = vmul.f32 1.0, %v270
    %v272 = vrcp.pop %v240
    %v273 = vmul.f32 %v240, %v272
    %v274 = vsub.f32 1.0, %v273
    %v275 = vmul.f32 %v272, %v274
    %v276 = vadd.f32 %v272, %v275
    %vm277 = vweird.f32 %v240
    %vm278 = vweird.f32 %v272
    %vm279 = vmor %vm277, %vm278
    %v280 = vsel %vm279, %v272, %v276
    %v281 = vand.u32 2147483647, %v240
    %vm282 = vcmp.eq.f32.partialorder %v281, 8.507059e+37
    %v283 = vand.u32 %v240, 2147483648
    %v284 = vor.u32 1.1754944e-38, %v283
    %v285 = vsel %vm282, %v284, %v280
    %v286 = vmul.f32 1.0, %v285
    %v287 = vrcp.pop %v241
    %v288 = vmul.f32 %v241, %v287
    %v289 = vsub.f32 1.0, %v288
    %v290 = vmul.f32 %v287, %v289
    %v291 = vadd.f32 %v287, %v290
    %vm292 = vweird.f32 %v241
    %vm293 = vweird.f32 %v287
    %vm294 = vmor %vm292, %vm293
    %v295 = vsel %vm294, %v287, %v291
    %v296 = vand.u32 2147483647, %v241
    %vm297 = vcmp.eq.f32.partialorder %v296, 8.507059e+37
    %v298 = vand.u32 %v241, 2147483648
    %v299 = vor.u32 1.1754944e-38, %v298
    %v300 = vsel %vm297, %v299, %v295
    %v301 = vmul.f32 1.0, %v300
    %v302 = vmul.f32 %v152, %v256
    %v303 = vmul.f32 %v175, %v271
    %v304 = vmul.f32 %v155, %v286
    %v305 = vmul.f32 %v178, %v301
    %v306 = vmul.f32 %v302, %v198
    %v307 = vmul.f32 %v303, %v221
    %v308 = vmul.f32 %v304, %v201
    %v309 = vmul.f32 %v305, %v224
    %v310 = vld [vmem:[#allocation2] sm:$0xff]
    %v311 = vld [vmem:[#allocation2 + $0x8] sm:$0xff]
    %v312 = vld [vmem:[#allocation8] sm:$0xff]
    %v313 = vld [vmem:[#allocation8 + $0x8] sm:$0xff]
    %v314 = vld [vmem:[#allocation8 + $0x10] sm:$0xff]
    %v315 = vld [vmem:[#allocation8 + $0x18] sm:$0xff]
    %v316 = vld [vmem:[#allocation8 + $0x20] sm:$0xff]
    %v317 = vld [vmem:[#allocation8 + $0x28] sm:$0xff]
    %v318 = vld [vmem:[#allocation8 + $0x30] sm:$0xff]
    %v319 = vld [vmem:[#allocation8 + $0x38] sm:$0xff]
    %v320 = vld [vmem:[#allocation8 + $0x40] sm:$0xff]
    %v321 = vld [vmem:[#allocation8 + $0x48] sm:$0xff]
    %v322 = vld [vmem:[#allocation8 + $0x50] sm:$0xff]
    %v323 = vld [vmem:[#allocation8 + $0x58] sm:$0xff]
    %v324 = vld [vmem:[#allocation8 + $0x60] sm:$0xff]
    %v325 = vld [vmem:[#allocation8 + $0x68] sm:$0xff]
    %v326 = vld [vmem:[#allocation8 + $0x70] sm:$0xff]
    %v327 = vld [vmem:[#allocation8 + $0x78] sm:$0xff]
    %v328 = vld [vmem:[#allocation8 + $0x80] sm:$0xff]
    %v329 = vld [vmem:[#allocation8 + $0x88] sm:$0xff]
    %v330 = vld [vmem:[#allocation8 + $0x90] sm:$0xff]
    %v331 = vld [vmem:[#allocation8 + $0x98] sm:$0xff]
    %v332 = vld [vmem:[#allocation8 + $0xa0] sm:$0xff]
    %v333 = vld [vmem:[#allocation8 + $0xa8] sm:$0xff]
    %v334 = vld [vmem:[#allocation8 + $0xb0] sm:$0xff]
    %v335 = vld [vmem:[#allocation8 + $0xb8] sm:$0xff]
    %v336 = vld [vmem:[#allocation8 + $0xc0] sm:$0xff]
    %v337 = vld [vmem:[#allocation8 + $0xc8] sm:$0xff]
    %v338 = vld [vmem:[#allocation8 + $0xd0] sm:$0xff]
    %v339 = vld [vmem:[#allocation8 + $0xd8] sm:$0xff]
    %v340 = vld [vmem:[#allocation8 + $0xe0] sm:$0xff]
    %v341 = vld [vmem:[#allocation8 + $0xe8] sm:$0xff]
    %v342 = vld [vmem:[#allocation8 + $0xf0] sm:$0xff]
    %v343 = vld [vmem:[#allocation8 + $0xf8] sm:$0xff]
    %344 = vmatpush.msra.mxu0 %v327
    %345 = vmatpush.msra.mxu0 %v326
    %346 = vmatpush.msra.mxu0 %v325
    %347 = vmatpush.msra.mxu0 %v324
    %348 = vmatpush.msra.mxu0 %v323
    %349 = vmatpush.msra.mxu0 %v322
    %350 = vmatpush.msra.mxu0 %v321
    %351 = vmatpush.msra.mxu0 %v320
    %352 = vmatpush.msra.mxu0 %v319
    %353 = vmatpush.msra.mxu0 %v318
    %354 = vmatpush.msra.mxu0 %v317
    %355 = vmatpush.msra.mxu0 %v316
    %356 = vmatpush.msra.mxu0 %v315
    %357 = vmatpush.msra.mxu0 %v314
    %358 = vmatpush.msra.mxu0 %v313
    %359 = vmatpush.msra.mxu0 %v312
    %360 = vmatmul.f32.gmra.mxu0 %v306
    %v361 = vpop.f32.mrf.mxu0
    %v362 = vadd.f32 0.0, %v361
    %363 = vmatmul.f32.gmra.mxu0 %v308
    %v364 = vpop.f32.mrf.mxu0
    %v365 = vadd.f32 0.0, %v364
    %366 = vdwg.mxu0
    %367 = vmatpush.msra.mxu0 %v343
    %368 = vmatpush.msra.mxu0 %v342
    %369 = vmatpush.msra.mxu0 %v341
    %370 = vmatpush.msra.mxu0 %v340
    %371 = vmatpush.msra.mxu0 %v339
    %372 = vmatpush.msra.mxu0 %v338
    %373 = vmatpush.msra.mxu0 %v337
    %374 = vmatpush.msra.mxu0 %v336
    %375 = vmatpush.msra.mxu0 %v335
    %376 = vmatpush.msra.mxu0 %v334
    %377 = vmatpush.msra.mxu0 %v333
    %378 = vmatpush.msra.mxu0 %v332
    %379 = vmatpush.msra.mxu0 %v331
    %380 = vmatpush.msra.mxu0 %v330
    %381 = vmatpush.msra.mxu0 %v329
    %382 = vmatpush.msra.mxu0 %v328
    %383 = vmatmul.f32.gmra.mxu0 %v307
    %v384 = vpop.f32.mrf.mxu0
    %v385 = vadd.f32 %v362, %v384
    %386 = vmatmul.f32.gmra.mxu0 %v309
    %v387 = vpop.f32.mrf.mxu0
    %v388 = vadd.f32 %v365, %v387
    %389 = vdwg.mxu0
    %v390 = vadd.f32 %v310, %v385
    %v391 = vadd.f32 %v311, %v388
    %392 = vst [vmem:[#allocation2] sm:$0xff] %v390
    %393 = vst [vmem:[#allocation2 + $0x8] sm:$0xff] %v391
    // Predicated region
    $region30: #{tpu_custom_call.1} parent=1 // pred_check
      %p394 = pneg %p62
    $region31: #{tpu_custom_call.1} parent=1 // pred_check_branch
      %396 = sbr.rel (%p394) target = $region33
    $region32: #{tpu_custom_call.1} parent=1 // pred_region
      %v397 = vld [vmem:[#allocation2] sm:$0xff]
      %v398 = vld [vmem:[#allocation2 + $0x8] sm:$0xff]
      %399 = vst [vmem:[#allocation9] sm:$0xff] %v397
      %400 = vst [vmem:[#allocation9 + $0x8] sm:$0xff] %v398
    $region33: #{tpu_custom_call.1} parent=1 // pred_fallthru
      _
    // Predicated region
    $region34: #{tpu_custom_call.1} parent=1 // pred_check
      _
    $region35: #{tpu_custom_call.1} parent=1 // pred_check_branch
      %402 = sbr.rel (0) target = $region37
    $region36: #{tpu_custom_call.1} parent=1 // pred_region
      %404 = vsyncadd [#allocation5], 0
      %s405 = sshll.u32 [#allocation9], 4
      %s406 = int_to_ptr.vmem [resolvable:$true] %s405
      %s407 = sshll.u32 %s3, 4
      %s408 = int_to_ptr.hbm [resolvable:$true] %s407
      %413 = dma.vmem_to_hbm [thread:$0]  %s406, 256, %s408, [#allocation5], 128, 128, 8
    $region37: #{tpu_custom_call.1} parent=1 // pred_fallthru
      _
    // Predicated region
    $region38: #{tpu_custom_call.1} parent=1 // pred_check
      _
    $region39: #{tpu_custom_call.1} parent=1 // pred_check_branch
      %415 = sbr.rel (0) target = $region41
    $region40: #{tpu_custom_call.1} parent=1 // pred_region
      %417 = dma.done [#allocation5], 256
    $region41: #{tpu_custom_call.1} parent=1 // pred_fallthru
      _
    %418 = vsyncpa [#allocation4], 1
    %419 = vsyncpa [#allocation7], 1
    %420 = vsyncpa [#allocation5], 1

// kernel: tpu_custom_call.1
$region0: #{tpu_custom_call.1}
  #allocation0 [shape = 'u32[]', space=smem, size = 0x4, offset = 0x4, fixed_abs, tag = 'smem constant byte address 0x4 - core index']
  #allocation1 [shape = 'u32[72,128]{1,0:T(1,128)}', space=vmem, size = 0x9000, scoped, tag = 'internal scratch']
  #allocation2 [shape = 'f32[16,128]{1,0:T(8,128)}', space=vmem, size = 0x2000, scoped, tag = 'scratch operand']
  %s0 = inlined_call_operand.hbm [shape: f32[16,128], index: 0, kind: input, shape index: {}]
  %s1 = inlined_call_operand.hbm [shape: f32[128,512], index: 1, kind: input, shape index: {}]
  %s2 = inlined_call_operand.hbm [shape: f32[256,128], index: 2, kind: input, shape index: {}]
  %s3 = inlined_call_operand.hbm [shape: f32[16,128], index: 3, kind: output, shape index: {}]
  %s4 = sld [smem:[#allocation0]]
  $region42: #{tpu_custom_call.1} parent=0
    _
  %s6 = ssub.s32 1, %s4
  %s7 = scalar_select 0, %s6, %s4
  $region1: #{tpu_custom_call.1} parent=0
    #allocation3 [shape = 'u8[8192]{0}', space=vmem, size = 0x2000, scoped, tag = 'input window, operand 0, single buffered']
    #allocation4 [shape = 's32[1]{0}', space=sflag, size = 0x4, scoped, tag = 'scoped memory for tpu_custom_call.1']
    #allocation5 [shape = 's32[1]{0}', space=sflag, size = 0x4, scoped, tag = 'scoped memory for tpu_custom_call.1']
    #allocation6 [shape = 'u8[262144]{0}', space=vmem, size = 0x40000, scoped, tag = 'input window, operand 1, single buffered']
    #allocation7 [shape = 's32[1]{0}', space=sflag, size = 0x4, scoped, tag = 'scoped memory for tpu_custom_call.1']
    #allocation8 [shape = 'u8[131072]{0}', space=vmem, size = 0x20000, scoped, tag = 'input window, operand 2, single buffered']
    #allocation9 [shape = 'u8[8192]{0}', space=vmem, size = 0x2000, scoped, tag = 'output window, operand 0, single buffered']
    %8 = vsyncpa [#allocation4], 0
    %9 = vsyncpa [#allocation7], 0
    %10 = vsyncpa [#allocation5], 0
    // Predicated region
    $region2: #{tpu_custom_call.1} parent=1 // pred_check
      _
    $region3: #{tpu_custom_call.1} parent=1 // pred_check_branch
      %12 = sbr.rel (0) target = $region5
    $region4: #{tpu_custom_call.1} parent=1 // pred_region
      %14 = vsyncadd [#allocation4], 0
      %s15 = sshll.u32 %s0, 4
      %s16 = int_to_ptr.hbm [resolvable:$true] %s15
      %s17 = sshll.u32 [#allocation3], 4
      %s18 = int_to_ptr.vmem [resolvable:$true] %s17
      %23 = dma.hbm_to_vmem [thread:$0]  %s16, 256, %s18, [#allocation4], 128, 128, 8
    $region5: #{tpu_custom_call.1} parent=1 // pred_fallthru
      _
    // Predicated region
    $region6: #{tpu_custom_call.1} parent=1 // pred_check
      _
    $region7: #{tpu_custom_call.1} parent=1 // pred_check_branch
      %25 = sbr.rel (0) target = $region9
    $region8: #{tpu_custom_call.1} parent=1 // pred_region
      %27 = vsyncadd [#allocation7], 0
      %s28 = sshll.u32 %s1, 4
      %s29 = int_to_ptr.hbm [resolvable:$true] %s28
      %s30 = sshll.u32 [#allocation6], 4
      %s31 = int_to_ptr.vmem [resolvable:$true] %s30
      %36 = dma.hbm_to_vmem [thread:$0]  %s29, 8192, %s31, [#allocation7], 512, 512, 32
    $region9: #{tpu_custom_call.1} parent=1 // pred_fallthru
      _
    // Predicated region
    $region10: #{tpu_custom_call.1} parent=1 // pred_check
      _
    $region11: #{tpu_custom_call.1} parent=1 // pred_check_branch
      %38 = sbr.rel (0) target = $region13
    $region12: #{tpu_custom_call.1} parent=1 // pred_region
      %40 = vsyncadd [#allocation7], 0
      %s41 = sshll.u32 %s2, 4
      %s42 = int_to_ptr.hbm [resolvable:$true] %s41
      %s43 = sshll.u32 [#allocation8], 4
      %s44 = int_to_ptr.vmem [resolvable:$true] %s43
      %49 = dma.hbm_to_vmem [thread:$0]  %s42, 4096, %s44, [#allocation7], 128, 128, 8
    $region13: #{tpu_custom_call.1} parent=1 // pred_fallthru
      _
    // Predicated region
    $region14: #{tpu_custom_call.1} parent=1 // pred_check
      _
    $region15: #{tpu_custom_call.1} parent=1 // pred_check_branch
      %51 = sbr.rel (0) target = $region17
    $region16: #{tpu_custom_call.1} parent=1 // pred_region
      %53 = dma.done [#allocation4], 256
    $region17: #{tpu_custom_call.1} parent=1 // pred_fallthru
      _
    // Predicated region
    $region18: #{tpu_custom_call.1} parent=1 // pred_check
      _
    $region19: #{tpu_custom_call.1} parent=1 // pred_check_branch
      %55 = sbr.rel (0) target = $region21
    $region20: #{tpu_custom_call.1} parent=1 // pred_region
      %57 = dma.done [#allocation7], 8192
    $region21: #{tpu_custom_call.1} parent=1 // pred_fallthru
      _
    // Predicated region
    $region22: #{tpu_custom_call.1} parent=1 // pred_check
      _
    $region23: #{tpu_custom_call.1} parent=1 // pred_check_branch
      %59 = sbr.rel (0) target = $region25
    $region24: #{tpu_custom_call.1} parent=1 // pred_region
      %61 = dma.done [#allocation7], 4096
    $region25: #{tpu_custom_call.1} parent=1 // pred_fallthru
      _
    %p62 = scmp.eq.s32.totalorder 0, 0
    // Predicated region
    $region26: #{tpu_custom_call.1} parent=1 // pred_check
      %p63 = pneg %p62
    $region27: #{tpu_custom_call.1} parent=1 // pred_check_branch
      %65 = sbr.rel (%p63) target = $region29
    $region28: #{tpu_custom_call.1} parent=1 // pred_region
      %66 = vst [vmem:[#allocation2] sm:$0xff] 0.0
      %67 = vst [vmem:[#allocation2 + $0x8] sm:$0xff] 0.0
    $region29: #{tpu_custom_call.1} parent=1 // pred_fallthru
      _
    %v68 = vld [vmem:[#allocation3] sm:$0xff]
    %v69 = vld [vmem:[#allocation3 + $0x8] sm:$0xff]
    %v70 = vld [vmem:[#allocation6] sm:$0xff]
    %v71 = vld [vmem:[#allocation6 + $0x8] sm:$0xff]
    %v72 = vld [vmem:[#allocation6 + $0x10] sm:$0xff]
    %v73 = vld [vmem:[#allocation6 + $0x18] sm:$0xff]
    %v74 = vld [vmem:[#allocation6 + $0x20] sm:$0xff]
    %v75 = vld [vmem:[#allocation6 + $0x28] sm:$0xff]
    %v76 = vld [vmem:[#allocation6 + $0x30] sm:$0xff]
    %v77 = vld [vmem:[#allocation6 + $0x38] sm:$0xff]
    %v78 = vld [vmem:[#allocation6 + $0x40] sm:$0xff]
    %v79 = vld [vmem:[#allocation6 + $0x48] sm:$0xff]
    %v80 = vld [vmem:[#allocation6 + $0x50] sm:$0xff]
    %v81 = vld [vmem:[#allocation6 + $0x58] sm:$0xff]
    %v82 = vld [vmem:[#allocation6 + $0x60] sm:$0xff]
    %v83 = vld [vmem:[#allocation6 + $0x68] sm:$0xff]
    %v84 = vld [vmem:[#allocation6 + $0x70] sm:$0xff]
    %v85 = vld [vmem:[#allocation6 + $0x78] sm:$0xff]
    %v86 = vld [vmem:[#allocation6 + $0x80] sm:$0xff]
    %v87 = vld [vmem:[#allocation6 + $0x88] sm:$0xff]
    %v88 = vld [vmem:[#allocation6 + $0x90] sm:$0xff]
    %v89 = vld [vmem:[#allocation6 + $0x98] sm:$0xff]
    %v90 = vld [vmem:[#allocation6 + $0xa0] sm:$0xff]
    %v91 = vld [vmem:[#allocation6 + $0xa8] sm:$0xff]
    %v92 = vld [vmem:[#allocation6 + $0xb0] sm:$0xff]
    %v93 = vld [vmem:[#allocation6 + $0xb8] sm:$0xff]
    %v94 = vld [vmem:[#allocation6 + $0xc0] sm:$0xff]
    %v95 = vld [vmem:[#allocation6 + $0xc8] sm:$0xff]
    %v96 = vld [vmem:[#allocation6 + $0xd0] sm:$0xff]
    %v97 = vld [vmem:[#allocation6 + $0xd8] sm:$0xff]
    %v98 = vld [vmem:[#allocation6 + $0xe0] sm:$0xff]
    %v99 = vld [vmem:[#allocation6 + $0xe8] sm:$0xff]
    %v100 = vld [vmem:[#allocation6 + $0xf0] sm:$0xff]
    %v101 = vld [vmem:[#allocation6 + $0xf8] sm:$0xff]
    %v102 = vld [vmem:[#allocation6 + $0x100] sm:$0xff]
    %v103 = vld [vmem:[#allocation6 + $0x108] sm:$0xff]
    %v104 = vld [vmem:[#allocation6 + $0x110] sm:$0xff]
    %v105 = vld [vmem:[#allocation6 + $0x118] sm:$0xff]
    %v106 = vld [vmem:[#allocation6 + $0x120] sm:$0xff]
    %v107 = vld [vmem:[#allocation6 + $0x128] sm:$0xff]
    %v108 = vld [vmem:[#allocation6 + $0x130] sm:$0xff]
    %v109 = vld [vmem:[#allocation6 + $0x138] sm:$0xff]
    %v110 = vld [vmem:[#allocation6 + $0x140] sm:$0xff]
    %v111 = vld [vmem:[#allocation6 + $0x148] sm:$0xff]
    %v112 = vld [vmem:[#allocation6 + $0x150] sm:$0xff]
    %v113 = vld [vmem:[#allocation6 + $0x158] sm:$0xff]
    %v114 = vld [vmem:[#allocation6 + $0x160] sm:$0xff]
    %v115 = vld [vmem:[#allocation6 + $0x168] sm:$0xff]
    %v116 = vld [vmem:[#allocation6 + $0x170] sm:$0xff]
    %v117 = vld [vmem:[#allocation6 + $0x178] sm:$0xff]
    %v118 = vld [vmem:[#allocation6 + $0x180] sm:$0xff]
    %v119 = vld [vmem:[#allocation6 + $0x188] sm:$0xff]
    %v120 = vld [vmem:[#allocation6 + $0x190] sm:$0xff]
    %v121 = vld [vmem:[#allocation6 + $0x198] sm:$0xff]
    %v122 = vld [vmem:[#allocation6 + $0x1a0] sm:$0xff]
    %v123 = vld [vmem:[#allocation6 + $0x1a8] sm:$0xff]
    %v124 = vld [vmem:[#allocation6 + $0x1b0] sm:$0xff]
    %v125 = vld [vmem:[#allocation6 + $0x1b8] sm:$0xff]
    %v126 = vld [vmem:[#allocation6 + $0x1c0] sm:$0xff]
    %v127 = vld [vmem:[#allocation6 + $0x1c8] sm:$0xff]
    %v128 = vld [vmem:[#allocation6 + $0x1d0] sm:$0xff]
    %v129 = vld [vmem:[#allocation6 + $0x1d8] sm:$0xff]
    %v130 = vld [vmem:[#allocation6 + $0x1e0] sm:$0xff]
    %v131 = vld [vmem:[#allocation6 + $0x1e8] sm:$0xff]
    %v132 = vld [vmem:[#allocation6 + $0x1f0] sm:$0xff]
    %v133 = vld [vmem:[#allocation6 + $0x1f8] sm:$0xff]
    %134 = vmatpush.msra.mxu0 %v130
    %135 = vmatpush.msra.mxu0 %v126
    %136 = vmatpush.msra.mxu0 %v122
    %137 = vmatpush.msra.mxu0 %v118
    %138 = vmatpush.msra.mxu0 %v114
    %139 = vmatpush.msra.mxu0 %v110
    %140 = vmatpush.msra.mxu0 %v106
    %141 = vmatpush.msra.mxu0 %v102
    %142 = vmatpush.msra.mxu0 %v98
    %143 = vmatpush.msra.mxu0 %v94
    %144 = vmatpush.msra.mxu0 %v90
    %145 = vmatpush.msra.mxu0 %v86
    %146 = vmatpush.msra.mxu0 %v82
    %147 = vmatpush.msra.mxu0 %v78
    %148 = vmatpush.msra.mxu0 %v74
    %149 = vmatpush.msra.mxu0 %v70
    %150 = vmatmul.f32.gmra.mxu0 %v68
    %v151 = vpop.f32.mrf.mxu0
    %v152 = vadd.f32 0.0, %v151
    %153 = vmatmul.f32.gmra.mxu0 %v69
    %v154 = vpop.f32.mrf.mxu0
    %v155 = vadd.f32 0.0, %v154
    %156 = vdwg.mxu0
    %157 = vmatpush.msra.mxu0 %v131
    %158 = vmatpush.msra.mxu0 %v127
    %159 = vmatpush.msra.mxu0 %v123
    %160 = vmatpush.msra.mxu0 %v119
    %161 = vmatpush.msra.mxu0 %v115
    %162 = vmatpush.msra.mxu0 %v111
    %163 = vmatpush.msra.mxu0 %v107
    %164 = vmatpush.msra.mxu0 %v103
    %165 = vmatpush.msra.mxu0 %v99
    %166 = vmatpush.msra.mxu0 %v95
    %167 = vmatpush.msra.mxu0 %v91
    %168 = vmatpush.msra.mxu0 %v87
    %169 = vmatpush.msra.mxu0 %v83
    %170 = vmatpush.msra.mxu0 %v79
    %171 = vmatpush.msra.mxu0 %v75
    %172 = vmatpush.msra.mxu0 %v71
    %173 = vmatmul.f32.gmra.mxu0 %v68
    %v174 = vpop.f32.mrf.mxu0
    %v175 = vadd.f32 0.0, %v174
    %176 = vmatmul.f32.gmra.mxu0 %v69
    %v177 = vpop.f32.mrf.mxu0
    %v178 = vadd.f32 0.0, %v177
    %179 = vdwg.mxu0
    %180 = vmatpush.msra.mxu0 %v132
    %181 = vmatpush.msra.mxu0 %v128
    %182 = vmatpush.msra.mxu0 %v124
    %183 = vmatpush.msra.mxu0 %v120
    %184 = vmatpush.msra.mxu0 %v116
    %185 = vmatpush.msra.mxu0 %v112
    %186 = vmatpush.msra.mxu0 %v108
    %187 = vmatpush.msra.mxu0 %v104
    %188 = vmatpush.msra.mxu0 %v100
    %189 = vmatpush.msra.mxu0 %v96
    %190 = vmatpush.msra.mxu0 %v92
    %191 = vmatpush.msra.mxu0 %v88
    %192 = vmatpush.msra.mxu0 %v84
    %193 = vmatpush.msra.mxu0 %v80
    %194 = vmatpush.msra.mxu0 %v76
    %195 = vmatpush.msra.mxu0 %v72
    %196 = vmatmul.f32.gmra.mxu0 %v68
    %v197 = vpop.f32.mrf.mxu0
    %v198 = vadd.f32 0.0, %v197
    %199 = vmatmul.f32.gmra.mxu0 %v69
    %v200 = vpop.f32.mrf.mxu0
    %v201 = vadd.f32 0.0, %v200
    %202 = vdwg.mxu0
    %203 = vmatpush.msra.mxu0 %v133
    %204 = vmatpush.msra.mxu0 %v129
    %205 = vmatpush.msra.mxu0 %v125
    %206 = vmatpush.msra.mxu0 %v121
    %207 = vmatpush.msra.mxu0 %v117
    %208 = vmatpush.msra.mxu0 %v113
    %209 = vmatpush.msra.mxu0 %v109
    %210 = vmatpush.msra.mxu0 %v105
    %211 = vmatpush.msra.mxu0 %v101
    %212 = vmatpush.msra.mxu0 %v97
    %213 = vmatpush.msra.mxu0 %v93
    %214 = vmatpush.msra.mxu0 %v89
    %215 = vmatpush.msra.mxu0 %v85
    %216 = vmatpush.msra.mxu0 %v81
    %217 = vmatpush.msra.mxu0 %v77
    %218 = vmatpush.msra.mxu0 %v73
    %219 = vmatmul.f32.gmra.mxu0 %v68
    %v220 = vpop.f32.mrf.mxu0
    %v221 = vadd.f32 0.0, %v220
    %222 = vmatmul.f32.gmra.mxu0 %v69
    %v223 = vpop.f32.mrf.mxu0
    %v224 = vadd.f32 0.0, %v223
    %225 = vdwg.mxu0
    %v226 = vxor.u32 %v152, 2147483648
    %v227 = vxor.u32 %v175, 2147483648
    %v228 = vxor.u32 %v155, 2147483648
    %v229 = vxor.u32 %v178, 2147483648
    %v230 = vmul.f32 %v226, 1.442695
    %v231 = vpow.pop %v230
    %v232 = vmul.f32 %v227, 1.442695
    %v233 = vpow.pop %v232
    %v234 = vmul.f32 %v228, 1.442695
    %v235 = vpow.pop %v234
    %v236 = vmul.f32 %v229, 1.442695
    %v237 = vpow.pop %v236
    %v238 = vadd.f32 %v231, 1.0
    %v239 = vadd.f32 %v233, 1.0
    %v240 = vadd.f32 %v235, 1.0
    %v241 = vadd.f32 %v237, 1.0
    %v242 = vrcp.pop %v238
    %v243 = vmul.f32 %v238, %v242
    %v244 = vsub.f32 1.0, %v243
    %v245 = vmul.f32 %v242, %v244
    %v246 = vadd.f32 %v242, %v245
    %vm247 = vweird.f32 %v238
    %vm248 = vweird.f32 %v242
    %vm249 = vmor %vm247, %vm248
    %v250 = vsel %vm249, %v242, %v246
    %v251 = vand.u32 2147483647, %v238
    %vm252 = vcmp.eq.f32.partialorder %v251, 8.507059e+37
    %v253 = vand.u32 %v238, 2147483648
    %v254 = vor.u32 1.1754944e-38, %v253
    %v255 = vsel %vm252, %v254, %v250
    %v256 = vmul.f32 1.0, %v255
    %v257 = vrcp.pop %v239
    %v258 = vmul.f32 %v239, %v257
    %v259 = vsub.f32 1.0, %v258
    %v260 = vmul.f32 %v257, %v259
    %v261 = vadd.f32 %v257, %v260
    %vm262 = vweird.f32 %v239
    %vm263 = vweird.f32 %v257
    %vm264 = vmor %vm262, %vm263
    %v265 = vsel %vm264, %v257, %v261
    %v266 = vand.u32 2147483647, %v239
    %vm267 = vcmp.eq.f32.partialorder %v266, 8.507059e+37
    %v268 = vand.u32 %v239, 2147483648
    %v269 = vor.u32 1.1754944e-38, %v268
    %v270 = vsel %vm267, %v269, %v265
    %v271 = vmul.f32 1.0, %v270
    %v272 = vrcp.pop %v240
    %v273 = vmul.f32 %v240, %v272
    %v274 = vsub.f32 1.0, %v273
    %v275 = vmul.f32 %v272, %v274
    %v276 = vadd.f32 %v272, %v275
    %vm277 = vweird.f32 %v240
    %vm278 = vweird.f32 %v272
    %vm279 = vmor %vm277, %vm278
    %v280 = vsel %vm279, %v272, %v276
    %v281 = vand.u32 2147483647, %v240
    %vm282 = vcmp.eq.f32.partialorder %v281, 8.507059e+37
    %v283 = vand.u32 %v240, 2147483648
    %v284 = vor.u32 1.1754944e-38, %v283
    %v285 = vsel %vm282, %v284, %v280
    %v286 = vmul.f32 1.0, %v285
    %v287 = vrcp.pop %v241
    %v288 = vmul.f32 %v241, %v287
    %v289 = vsub.f32 1.0, %v288
    %v290 = vmul.f32 %v287, %v289
    %v291 = vadd.f32 %v287, %v290
    %vm292 = vweird.f32 %v241
    %vm293 = vweird.f32 %v287
    %vm294 = vmor %vm292, %vm293
    %v295 = vsel %vm294, %v287, %v291
    %v296 = vand.u32 2147483647, %v241
    %vm297 = vcmp.eq.f32.partialorder %v296, 8.507059e+37
    %v298 = vand.u32 %v241, 2147483648
    %v299 = vor.u32 1.1754944e-38, %v298
    %v300 = vsel %vm297, %v299, %v295
    %v301 = vmul.f32 1.0, %v300
    %v302 = vmul.f32 %v152, %v256
    %v303 = vmul.f32 %v175, %v271
    %v304 = vmul.f32 %v155, %v286
    %v305 = vmul.f32 %v178, %v301
    %v306 = vmul.f32 %v302, %v198
    %v307 = vmul.f32 %v303, %v221
    %v308 = vmul.f32 %v304, %v201
    %v309 = vmul.f32 %v305, %v224
    %v310 = vld [vmem:[#allocation2] sm:$0xff]
    %v311 = vld [vmem:[#allocation2 + $0x8] sm:$0xff]
    %v312 = vld [vmem:[#allocation8] sm:$0xff]
    %v313 = vld [vmem:[#allocation8 + $0x8] sm:$0xff]
    %v314 = vld [vmem:[#allocation8 + $0x10] sm:$0xff]
    %v315 = vld [vmem:[#allocation8 + $0x18] sm:$0xff]
    %v316 = vld [vmem:[#allocation8 + $0x20] sm:$0xff]
    %v317 = vld [vmem:[#allocation8 + $0x28] sm:$0xff]
    %v318 = vld [vmem:[#allocation8 + $0x30] sm:$0xff]
    %v319 = vld [vmem:[#allocation8 + $0x38] sm:$0xff]
    %v320 = vld [vmem:[#allocation8 + $0x40] sm:$0xff]
    %v321 = vld [vmem:[#allocation8 + $0x48] sm:$0xff]
    %v322 = vld [vmem:[#allocation8 + $0x50] sm:$0xff]
    %v323 = vld [vmem:[#allocation8 + $0x58] sm:$0xff]
    %v324 = vld [vmem:[#allocation8 + $0x60] sm:$0xff]
    %v325 = vld [vmem:[#allocation8 + $0x68] sm:$0xff]
    %v326 = vld [vmem:[#allocation8 + $0x70] sm:$0xff]
    %v327 = vld [vmem:[#allocation8 + $0x78] sm:$0xff]
    %v328 = vld [vmem:[#allocation8 + $0x80] sm:$0xff]
    %v329 = vld [vmem:[#allocation8 + $0x88] sm:$0xff]
    %v330 = vld [vmem:[#allocation8 + $0x90] sm:$0xff]
    %v331 = vld [vmem:[#allocation8 + $0x98] sm:$0xff]
    %v332 = vld [vmem:[#allocation8 + $0xa0] sm:$0xff]
    %v333 = vld [vmem:[#allocation8 + $0xa8] sm:$0xff]
    %v334 = vld [vmem:[#allocation8 + $0xb0] sm:$0xff]
    %v335 = vld [vmem:[#allocation8 + $0xb8] sm:$0xff]
    %v336 = vld [vmem:[#allocation8 + $0xc0] sm:$0xff]
    %v337 = vld [vmem:[#allocation8 + $0xc8] sm:$0xff]
    %v338 = vld [vmem:[#allocation8 + $0xd0] sm:$0xff]
    %v339 = vld [vmem:[#allocation8 + $0xd8] sm:$0xff]
    %v340 = vld [vmem:[#allocation8 + $0xe0] sm:$0xff]
    %v341 = vld [vmem:[#allocation8 + $0xe8] sm:$0xff]
    %v342 = vld [vmem:[#allocation8 + $0xf0] sm:$0xff]
    %v343 = vld [vmem:[#allocation8 + $0xf8] sm:$0xff]
    %344 = vmatpush.msra.mxu0 %v327
    %345 = vmatpush.msra.mxu0 %v326
    %346 = vmatpush.msra.mxu0 %v325
    %347 = vmatpush.msra.mxu0 %v324
    %348 = vmatpush.msra.mxu0 %v323
    %349 = vmatpush.msra.mxu0 %v322
    %350 = vmatpush.msra.mxu0 %v321
    %351 = vmatpush.msra.mxu0 %v320
    %352 = vmatpush.msra.mxu0 %v319
    %353 = vmatpush.msra.mxu0 %v318
    %354 = vmatpush.msra.mxu0 %v317
    %355 = vmatpush.msra.mxu0 %v316
    %356 = vmatpush.msra.mxu0 %v315
    %357 = vmatpush.msra.mxu0 %v314
    %358 = vmatpush.msra.mxu0 %v313
    %359 = vmatpush.msra.mxu0 %v312
    %360 = vmatmul.f32.gmra.mxu0 %v306
    %v361 = vpop.f32.mrf.mxu0
    %v362 = vadd.f32 0.0, %v361
    %363 = vmatmul.f32.gmra.mxu0 %v308
    %v364 = vpop.f32.mrf.mxu0
    %v365 = vadd.f32 0.0, %v364
    %366 = vdwg.mxu0
    %367 = vmatpush.msra.mxu0 %v343
    %368 = vmatpush.msra.mxu0 %v342
    %369 = vmatpush.msra.mxu0 %v341
    %370 = vmatpush.msra.mxu0 %v340
    %371 = vmatpush.msra.mxu0 %v339
    %372 = vmatpush.msra.mxu0 %v338
    %373 = vmatpush.msra.mxu0 %v337
    %374 = vmatpush.msra.mxu0 %v336
    %375 = vmatpush.msra.mxu0 %v335
    %376 = vmatpush.msra.mxu0 %v334
    %377 = vmatpush.msra.mxu0 %v333
    %378 = vmatpush.msra.mxu0 %v332
    %379 = vmatpush.msra.mxu0 %v331
    %380 = vmatpush.msra.mxu0 %v330
    %381 = vmatpush.msra.mxu0 %v329
    %382 = vmatpush.msra.mxu0 %v328
    %383 = vmatmul.f32.gmra.mxu0 %v307
    %v384 = vpop.f32.mrf.mxu0
    %v385 = vadd.f32 %v362, %v384
    %386 = vmatmul.f32.gmra.mxu0 %v309
    %v387 = vpop.f32.mrf.mxu0
    %v388 = vadd.f32 %v365, %v387
    %389 = vdwg.mxu0
    %v390 = vadd.f32 %v310, %v385
    %v391 = vadd.f32 %v311, %v388
    %392 = vst [vmem:[#allocation2] sm:$0xff] %v390
    %393 = vst [vmem:[#allocation2 + $0x8] sm:$0xff] %v391
    // Predicated region
    $region30: #{tpu_custom_call.1} parent=1 // pred_check
      %p394 = pneg %p62
    $region31: #{tpu_custom_call.1} parent=1 // pred_check_branch
      %396 = sbr.rel (%p394) target = $region33
    $region32: #{tpu_custom_call.1} parent=1 // pred_region
      %v397 = vld [vmem:[#allocation2] sm:$0xff]
      %v398 = vld [vmem:[#allocation2 + $0x8] sm:$0xff]
      %399 = vst [vmem:[#allocation9] sm:$0xff] %v397
      %400 = vst [vmem:[#allocation9 + $0x8] sm:$0xff] %v398
    $region33: #{tpu_custom_call.1} parent=1 // pred_fallthru
      _
    // Predicated region
    $region34: #{tpu_custom_call.1} parent=1 // pred_check
      _
    $region35: #{tpu_custom_call.1} parent=1 // pred_check_branch
      %402 = sbr.rel (0) target = $region37
    $region36: #{tpu_custom_call.1} parent=1 // pred_region
      %404 = vsyncadd [#allocation5], 0
      %s405 = sshll.u32 [#allocation9], 4
      %s406 = int_to_ptr.vmem [resolvable:$true] %s405
      %s407 = sshll.u32 %s3, 4
      %s408 = int_to_ptr.hbm [resolvable:$true] %s407
      %413 = dma.vmem_to_hbm [thread:$0]  %s406, 256, %s408, [#allocation5], 128, 128, 8
    $region37: #{tpu_custom_call.1} parent=1 // pred_fallthru
      _
    // Predicated region
    $region38: #{tpu_custom_call.1} parent=1 // pred_check
      _
    $region39: #{tpu_custom_call.1} parent=1 // pred_check_branch
      %415 = sbr.rel (0) target = $region41
    $region40: #{tpu_custom_call.1} parent=1 // pred_region
      %417 = dma.done [#allocation5], 256
    $region41: #{tpu_custom_call.1} parent=1 // pred_fallthru
      _
    %418 = vsyncpa [#allocation4], 1
    %419 = vsyncpa [#allocation7], 1
    %420 = vsyncpa [#allocation5], 1

</llo_original>
